<compile_context>
chip_gen: v7x
topology: tpu7x:2x2x1
jax: 0.10.0
libtpu: 0.0.40
codegen_flags: <defaults>
</compile_context>

<pallas_src>
import functools

import jax
import jax.numpy as jnp
from jax import lax
from jax.experimental import pallas as pl
from jax.experimental.pallas import tpu as pltpu

LANES = 128
SUBLANES = 8
BLOCK_BYTES_BUDGET = 4 * 1024 * 1024     # ~4 MiB per input block (dtype-aware rows)
CHUNK_ROWS = 512                         # in-kernel streaming chunk (256 KiB f32)
VMEM_LIMIT_BYTES = 32 * 1024 * 1024      # 2 inputs x 2 bufs x 4 MiB = 16 MiB + headroom


def _detect_num_partials():
    # The 2-way 'parallel' split only pays off on parts with 2 TensorCores per
    # chip (v7x); on single-TC v5e/v6e it just risks one wasted clamped block.
    try:
        kind = jax.devices()[0].device_kind.lower()
    except Exception:
        return 1
    return 2 if ("v7" in kind or "7x" in kind) else 1


NUM_PARTIALS = _detect_num_partials()


def _fold_to_sublane_tile(x, nrows):
    """(nrows, 128) f32 -> (8, 128) sum via layout-preserving whole-vreg adds."""
    g = nrows // SUBLANES
    if g == 1:
        return x.reshape(SUBLANES, LANES)
    g1 = 1
    for cand in (16, 8, 4, 2):
        if g % cand == 0:
            g1 = cand
            break
    if g1 > 1:
        y = x.reshape(g1, g // g1, SUBLANES, LANES)
        return y.sum(axis=1).sum(axis=0)          # two-level tree: short chains
    return x.reshape(g, SUBLANES, LANES).sum(axis=0)


def _combined_loss_kernel(pred_ref, tgt_ref, sq_ref, sl1_ref, *,
                          rows, rows_tile, chunk_rows, blocks_per_partial,
                          total_blocks, need_mask):
    """Accumulates (8,128) f32 partial sums of squared-error and smooth-L1."""
    c = pl.program_id(0)   # partial index ('parallel' axis)
    i = pl.program_id(1)   # reduction step ('arbitrary' axis)

    @pl.when(i == 0)
    def _init():
        sq_ref[...] = jnp.zeros_like(sq_ref)
        sl1_ref[...] = jnp.zeros_like(sl1_ref)

    n_full = rows_tile // chunk_rows
    rem = rows_tile - n_full * chunk_rows                 # static, multiple of 8
    blk_row0 = (c * blocks_per_partial + i) * rows_tile   # unclamped global row base

    def chunk_sums(row_in_blk, nrows, masked):
        if isinstance(row_in_blk, int):
            r0 = row_in_blk
        else:
            r0 = pl.multiple_of(row_in_blk, SUBLANES)
        p = pred_ref[pl.ds(r0, nrows), :].astype(jnp.float32)
        t = tgt_ref[pl.ds(r0, nrows), :].astype(jnp.float32)
        d = p - t
        sq = d * d
        ad = jnp.abs(d)
        # SmoothL1 (beta=1.0, PyTorch default): 0.5*d^2 if |d| < 1 else |d| - 0.5
        sl1 = jnp.where(ad < 1.0, 0.5 * sq, ad - 0.5)
        if masked:
            gr = (blk_row0 + row_in_blk
                  + lax.broadcasted_iota(jnp.int32, (nrows, LANES), 0))
            valid = gr < rows
            sq = jnp.where(valid, sq, 0.0)
            sl1 = jnp.where(valid, sl1, 0.0)
        return (_fold_to_sublane_tile(sq, nrows),
                _fold_to_sublane_tile(sl1, nrows))

    def block_sums(masked):
        def body(ci, carry):
            sq_acc, sl1_acc = carry
            sq8, sl18 = chunk_sums(ci * chunk_rows, chunk_rows, masked)
            return sq_acc + sq8, sl1_acc + sl18
        init = (jnp.zeros((SUBLANES, LANES), jnp.float32),
                jnp.zeros((SUBLANES, LANES), jnp.float32))
        sq_acc, sl1_acc = lax.fori_loop(0, n_full, body, init)
        if rem:
            sq8, sl18 = chunk_sums(n_full * chunk_rows, rem, masked)
            sq_acc = sq_acc + sq8
            sl1_acc = sl1_acc + sl18
        return sq_acc, sl1_acc

    if need_mask:
        # Only the last real block (partial rows from Pallas block padding) and
        # any clamped duplicate block need the mask; everything else runs the
        # cheap unmasked path.
        is_tail = (c * blocks_per_partial + i) >= (total_blocks - 1)

        @pl.when(is_tail)
        def _tail():
            sq8, sl18 = block_sums(True)
            sq_ref[0] += sq8
            sl1_ref[0] += sl18

        @pl.when(jnp.logical_not(is_tail))
        def _body():
            sq8, sl18 = block_sums(False)
            sq_ref[0] += sq8
            sl1_ref[0] += sl18
    else:
        sq8, sl18 = block_sums(False)
        sq_ref[0] += sq8
        sl1_ref[0] += sl18


@functools.partial(jax.jit, static_argnames=("alpha",))
def combined_loss(pred, target, alpha=0.8):
    assert pred.shape == target.shape
    n_elems = pred.size

    p = pred.reshape(-1)
    t = target.reshape(-1)

    # Zero-pad only when needed so the flat tensors reshape to (rows, 128) with
    # rows % 8 == 0. Padded zeros give diff == 0 -> contribute 0 to both sums.
    pad_unit = SUBLANES * LANES
    n_pad = (-n_elems) % pad_unit
    if n_pad:
        # TODO(synk): a manual-DMA ragged tail (1-D HBM ref) would avoid this
        # padded full-tensor copy for sizes that are not a multiple of 1024.
        p = jnp.pad(p, (0, n_pad))
        t = jnp.pad(t, (0, n_pad))

    rows = p.size // LANES            # always a multiple of 8
    p2 = p.reshape(rows, LANES)
    t2 = t.reshape(rows, LANES)

    # Dtype-aware tile: ~4 MiB per input block regardless of itemsize.
    itemsize = jnp.dtype(pred.dtype).itemsize
    rows_budget = max(
        SUBLANES,
        (BLOCK_BYTES_BUDGET // (LANES * itemsize)) // SUBLANES * SUBLANES)
    rows_tile = min(rows_budget, rows)          # multiple of 8 by construction
    chunk_rows = min(CHUNK_ROWS, rows_tile)

    total_blocks = -(-rows // rows_tile)
    bp = -(-total_blocks // NUM_PARTIALS)       # inner grid extent per partial
    need_clamp = (bp * NUM_PARTIALS) != total_blocks
    need_mask = need_clamp or (rows % rows_tile != 0)

    def in_index(c, i):
        b = c * bp + i
        if need_clamp:
            b = jnp.minimum(b, total_blocks - 1)   # duplicate block, fully masked
        return (b, 0)

    def out_index(c, i):
        return (c, 0, 0)

    kernel = functools.partial(
        _combined_loss_kernel,
        rows=rows,
        rows_tile=rows_tile,
        chunk_rows=chunk_rows,
        blocks_per_partial=bp,
        total_blocks=total_blocks,
        need_mask=need_mask,
    )

    cost = pl.CostEstimate(
        flops=8 * n_elems,
        transcendentals=0,
        bytes_accessed=2 * n_elems * itemsize
        + 2 * NUM_PARTIALS * SUBLANES * LANES * 4,
    )

    sq_parts, sl1_parts = pl.pallas_call(
        kernel,
        out_shape=(
            jax.ShapeDtypeStruct((NUM_PARTIALS, SUBLANES, LANES), jnp.float32),
            jax.ShapeDtypeStruct((NUM_PARTIALS, SUBLANES, LANES), jnp.float32),
        ),
        grid_spec=pltpu.PrefetchScalarGridSpec(
            num_scalar_prefetch=0,
            grid=(NUM_PARTIALS, bp),
            in_specs=[
                pl.BlockSpec((rows_tile, LANES), in_index),
                pl.BlockSpec((rows_tile, LANES), in_index),
            ],
            out_specs=[
                pl.BlockSpec((1, SUBLANES, LANES), out_index),
                pl.BlockSpec((1, SUBLANES, LANES), out_index),
            ],
        ),
        compiler_params=pltpu.CompilerParams(
            dimension_semantics=("parallel", "arbitrary"),
            vmem_limit_bytes=VMEM_LIMIT_BYTES,
        ),
        cost_estimate=cost,
    )(p2, t2)

    inv_n = 1.0 / float(n_elems)
    mse = jnp.sum(sq_parts) * inv_n
    smooth_l1 = jnp.sum(sl1_parts) * inv_n
    return alpha * mse + (1.0 - alpha) * smooth_l1


def _reference(pred, target, alpha=0.8):
    d = pred.astype(jnp.float32) - target.astype(jnp.float32)
    mse = jnp.mean(d * d)
    ad = jnp.abs(d)
    sl1 = jnp.mean(jnp.where(ad < 1.0, 0.5 * d * d, ad - 0.5))
    return alpha * mse + (1.0 - alpha) * sl1


if __name__ == "__main__":
    key = jax.random.PRNGKey(0)
    k1, k2, k3, k4, k5, k6 = jax.random.split(key, 6)

    # Small NCHW regression-style output.
    pred = jax.random.normal(k1, (2, 4, 16, 16), dtype=jnp.float32)
    target = jax.random.normal(k2, (2, 4, 16, 16), dtype=jnp.float32)
    out = jax.block_until_ready(combined_loss(pred, target, alpha=0.8))
    ref = _reference(pred, target, alpha=0.8)
    assert jnp.allclose(out, ref, rtol=1e-5, atol=1e-6), (out, ref)

    # Ragged size: exercises the pad + gated in-kernel mask path.
    pred2 = jax.random.normal(k3, (2, 3, 5, 7), dtype=jnp.float32) * 2.0
    target2 = jax.random.normal(k4, (2, 3, 5, 7), dtype=jnp.float32)
    out2 = jax.block_until_ready(combined_loss(pred2, target2, alpha=0.8))
    ref2 = _reference(pred2, target2, alpha=0.8)
    assert jnp.allclose(out2, ref2, rtol=1e-5, atol=1e-6), (out2, ref2)

    # Multi-chunk block: exercises the in-kernel fori_loop streaming path.
    pred3 = jax.random.normal(k5, (8, 16, 32, 32), dtype=jnp.float32)
    target3 = jax.random.normal(k6, (8, 16, 32, 32), dtype=jnp.float32)
    out3 = jax.block_until_ready(combined_loss(pred3, target3, alpha=0.8))
    ref3 = _reference(pred3, target3, alpha=0.8)
    assert jnp.allclose(out3, ref3, rtol=1e-5, atol=1e-6), (out3, ref3)

    print("KERNEL_OK")
</pallas_src>

<mosaic_0001>
module attributes {stable_mosaic.version = 11 : i64} {
  func.func @_combined_loss_kernel(%arg0: i32, %arg1: i32, %arg2: memref<16x128xf32, #tpu.memory_space<vmem>>, %arg3: memref<16x128xf32, #tpu.memory_space<vmem>>, %arg4: memref<1x8x128xf32, #tpu.memory_space<vmem>>, %arg5: memref<1x8x128xf32, #tpu.memory_space<vmem>>) attributes {dimension_semantics = [#tpu.dimension_semantics<parallel>, #tpu.dimension_semantics<arbitrary>], iteration_bounds = array<i64: 1, 1>, scalar_prefetch = 0 : i64, scratch_operands = 0 : i64, tpu.core_type = #tpu.core_type<tc>, window_params = [{transform_indices = @transform_0, window_bounds = array<i64: 16, 128>}, {transform_indices = @transform_1, window_bounds = array<i64: 16, 128>}, {transform_indices = @transform_2, window_bounds = array<i64: 1, 8, 128>}, {transform_indices = @transform_3, window_bounds = array<i64: 1, 8, 128>}]} {
    %c0_i32 = arith.constant 0 : i32
    %0 = arith.cmpi eq, %arg1, %c0_i32 : i32
    %1 = arith.extui %0 : i1 to i32
    %c0_i32_0 = arith.constant 0 : i32
    %2 = arith.cmpi ne, %1, %c0_i32_0 : i32
    scf.if %2 {
      %cst_23 = arith.constant 0.000000e+00 : f32
      %41 = vector.broadcast %cst_23 : f32 to vector<1x8x128xf32>
      %c0_24 = arith.constant 0 : index
      %c0_25 = arith.constant 0 : index
      %c0_26 = arith.constant 0 : index
      %42 = vector.load %arg4[%c0_24, %c0_25, %c0_26] : memref<1x8x128xf32, #tpu.memory_space<vmem>>, vector<1x8x128xf32>
      tpu.vector_store %arg4[%c0_24, %c0_25, %c0_26], %41 {strides = array<i32>} : memref<1x8x128xf32, #tpu.memory_space<vmem>>, vector<1x8x128xf32>,
      %cst_27 = arith.constant 0.000000e+00 : f32
      %43 = vector.broadcast %cst_27 : f32 to vector<1x8x128xf32>
      %c0_28 = arith.constant 0 : index
      %c0_29 = arith.constant 0 : index
      %c0_30 = arith.constant 0 : index
      %44 = vector.load %arg5[%c0_28, %c0_29, %c0_30] : memref<1x8x128xf32, #tpu.memory_space<vmem>>, vector<1x8x128xf32>
      tpu.vector_store %arg5[%c0_28, %c0_29, %c0_30], %43 {strides = array<i32>} : memref<1x8x128xf32, #tpu.memory_space<vmem>>, vector<1x8x128xf32>,
    } else {
    }
    %cst = arith.constant 0.000000e+00 : f32
    %3 = vector.broadcast %cst : f32 to vector<8x128xf32>
    %cst_1 = arith.constant 0.000000e+00 : f32
    %4 = vector.broadcast %cst_1 : f32 to vector<8x128xf32>
    %c0_i32_2 = arith.constant 0 : i32
    %c16_i32 = arith.constant 16 : i32
    %5 = arith.muli %c0_i32_2, %c16_i32 : i32
    %6 = tpu.assume_multiple %5, 8 : i32
    %7 = arith.index_cast %6 : i32 to index
    %c0 = arith.constant 0 : index
    %8 = vector.load %arg2[%7, %c0] : memref<16x128xf32, #tpu.memory_space<vmem>>, vector<16x128xf32>
    %9 = arith.index_cast %6 : i32 to index
    %c0_3 = arith.constant 0 : index
    %10 = vector.load %arg3[%9, %c0_3] : memref<16x128xf32, #tpu.memory_space<vmem>>, vector<16x128xf32>
    %11 = arith.subf %8, %10 : vector<16x128xf32>
    %12 = arith.mulf %11, %11 : vector<16x128xf32>
    %13 = math.absf %11 : vector<16x128xf32>
    %cst_4 = arith.constant 1.000000e+00 : f32
    %14 = vector.broadcast %cst_4 : f32 to vector<16x128xf32>
    %15 = arith.cmpf olt, %13, %14 : vector<16x128xf32>
    %cst_5 = arith.constant 5.000000e-01 : f32
    %16 = vector.broadcast %cst_5 : f32 to vector<16x128xf32>
    %17 = arith.mulf %16, %12 : vector<16x128xf32>
    %cst_6 = arith.constant 5.000000e-01 : f32
    %18 = vector.broadcast %cst_6 : f32 to vector<16x128xf32>
    %19 = arith.subf %13, %18 : vector<16x128xf32>
    %20 = arith.select %15, %17, %19 : vector<16x128xi1>, vector<16x128xf32>
    %21 = vector.shape_cast %12 : vector<16x128xf32> to vector<2x1x8x128xf32>
    %cst_7 = arith.constant dense<0.000000e+00> : vector<2x8x128xf32>
    %22 = vector.multi_reduction <add>, %21, %cst_7 [1] : vector<2x1x8x128xf32> to vector<2x8x128xf32>
    %cst_8 = arith.constant dense<0.000000e+00> : vector<8x128xf32>
    %23 = vector.multi_reduction <add>, %22, %cst_8 [0] : vector<2x8x128xf32> to vector<8x128xf32>
    %24 = vector.shape_cast %20 : vector<16x128xf32> to vector<2x1x8x128xf32>
    %cst_9 = arith.constant dense<0.000000e+00> : vector<2x8x128xf32>
    %25 = vector.multi_reduction <add>, %24, %cst_9 [1] : vector<2x1x8x128xf32> to vector<2x8x128xf32>
    %cst_10 = arith.constant dense<0.000000e+00> : vector<8x128xf32>
    %26 = vector.multi_reduction <add>, %25, %cst_10 [0] : vector<2x8x128xf32> to vector<8x128xf32>
    %27 = arith.addf %3, %23 : vector<8x128xf32>
    %28 = arith.addf %4, %26 : vector<8x128xf32>
    %c1_i32 = arith.constant 1 : i32
    %c0_11 = arith.constant 0 : index
    %c0_12 = arith.constant 0 : index
    %c0_13 = arith.constant 0 : index
    %29 = vector.load %arg4[%c0_11, %c0_12, %c0_13] : memref<1x8x128xf32, #tpu.memory_space<vmem>>, vector<1x8x128xf32>
    %30 = vector.shape_cast %29 : vector<1x8x128xf32> to vector<8x128xf32>
    %31 = arith.addf %30, %27 : vector<8x128xf32>
    %c0_14 = arith.constant 0 : index
    %c0_15 = arith.constant 0 : index
    %c0_16 = arith.constant 0 : index
    %32 = vector.load %arg4[%c0_14, %c0_15, %c0_16] : memref<1x8x128xf32, #tpu.memory_space<vmem>>, vector<1x8x128xf32>
    %33 = vector.shape_cast %32 : vector<1x8x128xf32> to vector<8x128xf32>
    %34 = vector.shape_cast %31 : vector<8x128xf32> to vector<1x8x128xf32>
    tpu.vector_store %arg4[%c0_14, %c0_15, %c0_16], %34 {strides = array<i32>} : memref<1x8x128xf32, #tpu.memory_space<vmem>>, vector<1x8x128xf32>,
    %c0_17 = arith.constant 0 : index
    %c0_18 = arith.constant 0 : index
    %c0_19 = arith.constant 0 : index
    %35 = vector.load %arg5[%c0_17, %c0_18, %c0_19] : memref<1x8x128xf32, #tpu.memory_space<vmem>>, vector<1x8x128xf32>
    %36 = vector.shape_cast %35 : vector<1x8x128xf32> to vector<8x128xf32>
    %37 = arith.addf %36, %28 : vector<8x128xf32>
    %c0_20 = arith.constant 0 : index
    %c0_21 = arith.constant 0 : index
    %c0_22 = arith.constant 0 : index
    %38 = vector.load %arg5[%c0_20, %c0_21, %c0_22] : memref<1x8x128xf32, #tpu.memory_space<vmem>>, vector<1x8x128xf32>
    %39 = vector.shape_cast %38 : vector<1x8x128xf32> to vector<8x128xf32>
    %40 = vector.shape_cast %37 : vector<8x128xf32> to vector<1x8x128xf32>
    tpu.vector_store %arg5[%c0_20, %c0_21, %c0_22], %40 {strides = array<i32>} : memref<1x8x128xf32, #tpu.memory_space<vmem>>, vector<1x8x128xf32>,
    return
  }
  func.func @transform_0(%arg0: i32, %arg1: i32) -> (i32, i32) {
    %c1_i32 = arith.constant 1 : i32
    %0 = arith.muli %arg0, %c1_i32 : i32
    %1 = arith.addi %0, %arg1 : i32
    %c0_i32 = arith.constant 0 : i32
    %c0_i32_0 = arith.constant 0 : i32
    return %1, %c0_i32 : i32, i32
  }
  func.func @transform_1(%arg0: i32, %arg1: i32) -> (i32, i32) {
    %c1_i32 = arith.constant 1 : i32
    %0 = arith.muli %arg0, %c1_i32 : i32
    %1 = arith.addi %0, %arg1 : i32
    %c0_i32 = arith.constant 0 : i32
    %c0_i32_0 = arith.constant 0 : i32
    return %1, %c0_i32 : i32, i32
  }
  func.func @transform_2(%arg0: i32, %arg1: i32) -> (i32, i32, i32) {
    %c0_i32 = arith.constant 0 : i32
    %c0_i32_0 = arith.constant 0 : i32
    %c0_i32_1 = arith.constant 0 : i32
    return %arg0, %c0_i32, %c0_i32_0 : i32, i32, i32
  }
  func.func @transform_3(%arg0: i32, %arg1: i32) -> (i32, i32, i32) {
    %c0_i32 = arith.constant 0 : i32
    %c0_i32_0 = arith.constant 0 : i32
    %c0_i32_1 = arith.constant 0 : i32
    return %arg0, %c0_i32, %c0_i32_0 : i32, i32, i32
  }
}

</mosaic_0001>

<llo_original>
// kernel: combined_loss.1
$region0: #{combined_loss.1}
  #allocation0 [shape = 'u32[]', space=smem, size = 0x4, offset = 0x4, fixed_abs, tag = 'smem constant byte address 0x4 - core index']
  #allocation1 [shape = 'u32[144,128]{1,0:T(1,128)}', space=vmem, size = 0x12000, scoped, tag = 'internal scratch']
  %s0 = inlined_call_operand.vmem [shape: f32[16,128], index: 0, kind: input, shape index: {}]
  %s1 = inlined_call_operand.vmem [shape: f32[16,128], index: 1, kind: input, shape index: {}]
  %s2 = inlined_call_operand.vmem [shape: f32[1,8,128], index: 2, kind: output, shape index: {0}]
  %s3 = inlined_call_operand.vmem [shape: f32[1,8,128], index: 3, kind: output, shape index: {1}]
  %4 = xla_tuple %s2, %s3
  %s5 = sld [smem:[#allocation0]]
  $region30: #{combined_loss.1} parent=0
    _
  %s7 = ssub.s32 1, %s5
  %s8 = scalar_select 0, %s7, %s5
  // Predicated region
  $region2: #{combined_loss.1} parent=0 // pred_check
    _
  $region3: #{combined_loss.1} parent=0 // pred_check_branch
    %10 = sbr.rel (0) target = $region5
  $region4: #{combined_loss.1} parent=0 // pred_region
    %s11 = sadd.s32 0, 0
    %s12 = smul.u32 2, %s11
    %p13 = scmp.lt.s32.totalorder %s12, 1
    %s14 = scalar_select %p13, %s12, 1
    %s15 = smul.addr %s14, 8
    %s16 = scalar_lea.vmem %s0, %s15
    %s17 = sadd.s32 0, 0
    %s18 = smul.u32 2, %s17
  $region5: #{combined_loss.1} parent=0 // pred_fallthru
    _
  // Predicated region
  $region6: #{combined_loss.1} parent=0 // pred_check
    _
  $region7: #{combined_loss.1} parent=0 // pred_check_branch
    %20 = sbr.rel (0) target = $region9
  $region8: #{combined_loss.1} parent=0 // pred_region
    %s21 = sadd.s32 0, 0
    %s22 = smul.u32 2, %s21
    %p23 = scmp.lt.s32.totalorder %s22, 1
    %s24 = scalar_select %p23, %s22, 1
    %s25 = smul.addr %s24, 8
    %s26 = scalar_lea.vmem %s1, %s25
    %s27 = sadd.s32 0, 0
    %s28 = smul.u32 2, %s27
  $region9: #{combined_loss.1} parent=0 // pred_fallthru
    _
  %s29 = sadd.s32 0, 0
  %s30 = smul.u32 2, %s29
  %p31 = scmp.lt.s32.totalorder %s30, 1
  %s32 = scalar_select %p31, %s30, 1
  %s33 = smul.addr %s32, 8
  %s34 = scalar_lea.vmem %s0, %s33
  %s35 = sadd.s32 0, 0
  %s36 = smul.u32 2, %s35
  %p37 = scmp.lt.s32.totalorder %s36, 1
  %s38 = scalar_select %p37, %s36, 1
  %s39 = smul.addr %s38, 8
  %s40 = scalar_lea.vmem %s1, %s39
  %s41 = sadd.s32 0, 0
  %s42 = smul.u32 2, %s41
  %p43 = scmp.lt.s32.totalorder %s42, 1
  %s44 = scalar_select %p43, %s42, 1
  %s45 = smul.addr %s44, 8
  %s46 = scalar_lea.vmem %s0, %s45
  %s47 = sadd.s32 0, 0
  %s48 = smul.u32 2, %s47
  %s49 = sadd.s32 0, 0
  %s50 = smul.u32 2, %s49
  %p51 = scmp.lt.s32.totalorder %s50, 1
  %s52 = scalar_select %p51, %s50, 1
  %s53 = smul.addr %s52, 8
  %s54 = scalar_lea.vmem %s1, %s53
  %s55 = sadd.s32 0, 0
  %s56 = smul.u32 2, %s55
  %p57 = scmp.eq.s32.totalorder 0, 0
  // Predicated region
  $region10: #{combined_loss.1} parent=0 // pred_check
    %p58 = pneg %p57
  $region11: #{combined_loss.1} parent=0 // pred_check_branch
    %60 = sbr.rel (%p58) target = $region13
  $region12: #{combined_loss.1} parent=0 // pred_region
    %61 = vst [vmem:[%s2] sm:$0xff] 0.0
    %62 = vst [vmem:[%s3] sm:$0xff] 0.0
  $region13: #{combined_loss.1} parent=0 // pred_fallthru
    _
  %v63 = vld [vmem:[%s46] sm:$0xff]
  %v64 = vld [vmem:[%s46 + $0x8] sm:$0xff]
  %v65 = vld [vmem:[%s54] sm:$0xff]
  %v66 = vld [vmem:[%s54 + $0x8] sm:$0xff]
  %v67 = vsub.f32 %v63, %v65
  %v68 = vsub.f32 %v64, %v66
  %v69 = vmul.f32 %v67, %v67
  %v70 = vmul.f32 %v68, %v68
  %v71 = vand.u32 2147483647, %v67
  %v72 = vand.u32 2147483647, %v68
  %vm73 = vcmp.lt.f32.partialorder %v71, 1.0
  %vm74 = vcmp.lt.f32.partialorder %v72, 1.0
  %v75 = vmul.f32 %v69, 0.5
  %v76 = vmul.f32 %v70, 0.5
  %v77 = vsub.f32 %v71, 0.5
  %v78 = vsub.f32 %v72, 0.5
  %v79 = vsel %vm73, %v75, %v77
  %v80 = vsel %vm74, %v76, %v78
  %v81 = vadd.f32 %v69, 0.0
  %v82 = vadd.f32 %v70, 0.0
  %v83 = vadd.f32 %v81, %v82
  %v84 = vadd.f32 %v79, 0.0
  %v85 = vadd.f32 %v80, 0.0
  %v86 = vadd.f32 %v84, %v85
  %v87 = vadd.f32 %v83, 0.0
  %v88 = vadd.f32 %v86, 0.0
  %v89 = vld [vmem:[%s2] sm:$0xff]
  %v90 = vadd.f32 %v89, %v87
  %91 = vst [vmem:[%s2] sm:$0xff] %v90
  %v92 = vld [vmem:[%s3] sm:$0xff]
  %v93 = vadd.f32 %v92, %v88
  %94 = vst [vmem:[%s3] sm:$0xff] %v93
  // Predicated region
  $region14: #{combined_loss.1} parent=0 // pred_check
    _
  $region15: #{combined_loss.1} parent=0 // pred_check_branch
    %96 = sbr.rel (0) target = $region17
  $region16: #{combined_loss.1} parent=0 // pred_region
    _
  $region17: #{combined_loss.1} parent=0 // pred_fallthru
    _
  // Predicated region
  $region18: #{combined_loss.1} parent=0 // pred_check
    _
  $region19: #{combined_loss.1} parent=0 // pred_check_branch
    %98 = sbr.rel (0) target = $region21
  $region20: #{combined_loss.1} parent=0 // pred_region
    _
  $region21: #{combined_loss.1} parent=0 // pred_fallthru
    _
  // Predicated region
  $region22: #{combined_loss.1} parent=0 // pred_check
    _
  $region23: #{combined_loss.1} parent=0 // pred_check_branch
    %100 = sbr.rel (0) target = $region25
  $region24: #{combined_loss.1} parent=0 // pred_region
    _
  $region25: #{combined_loss.1} parent=0 // pred_fallthru
    _
  // Predicated region
  $region26: #{combined_loss.1} parent=0 // pred_check
    _
  $region27: #{combined_loss.1} parent=0 // pred_check_branch
    %102 = sbr.rel (0) target = $region29
  $region28: #{combined_loss.1} parent=0 // pred_region
    _
  $region29: #{combined_loss.1} parent=0 // pred_fallthru
    _

</llo_original>
